<compile_context>
chip_gen: v6e
topology: v6e:2x2x1
jax: 0.10.0
libtpu: 0.0.40
codegen_flags: <defaults>
</compile_context>

<pallas_src>
import math

import jax
import jax.numpy as jnp
from jax.experimental import pallas as pl
from jax.experimental.pallas import tpu as pltpu  # noqa: F401  (TPU backend)

SIZE_H1 = 50
SIZE_H2 = 100
SIZE_H3 = 60
BN_EPS = 1e-5
LANE = 128  # TPU lane width; all feature dims are padded to this.


def actor_kernel(s_ref, r_ref,
                 w1_ref, b1_ref,
                 w2_ref, b2_ref,
                 w3_ref, b3_ref,
                 w4_ref, b4_ref,
                 out_ref):
    s = s_ref[...]                       # [B, dim_s]
    r = r_ref[...]                       # [B, dim_r]
    dim_s = s.shape[1]
    dim_r = r.shape[1]

    # ---- layer 1: degenerate-K matmul done as VPU broadcast-MACs ----------
    # h1 = b1 + sum_k x[:, k] * W1[k, :], keeps the MXU off this layer's
    # critical path (K = dim_input ~ 3).
    acc = b1_ref[...]                    # (1, H1P) -> broadcasts to (B, H1P)
    for k in range(dim_s):
        acc = acc + s[:, k:k + 1] * w1_ref[k:k + 1, :]
    for k in range(dim_r):
        acc = acc + r[:, k:k + 1] * w1_ref[dim_s + k:dim_s + k + 1, :]
    h1 = jnp.maximum(acc, 0.0)           # [B, H1P]

    # ---- layer 2 + ReLU (lane-dense 128x128 MXU matmul) --------------------
    h2 = jnp.dot(h1, w2_ref[...], preferred_element_type=jnp.float32) + b2_ref[...]
    h2 = jnp.maximum(h2, 0.0)

    # ---- layer 3 + BatchNorm1d (training mode: batch stats, biased var) ----
    h3 = jnp.dot(h2, w3_ref[...], preferred_element_type=jnp.float32) + b3_ref[...]
    mean = jnp.mean(h3, axis=0, keepdims=True)          # sublane reduction
    centered = h3 - mean
    var = jnp.mean(centered * centered, axis=0, keepdims=True)
    h3n = centered * jax.lax.rsqrt(var + BN_EPS)
    # Padded lanes: h3 == 0 there -> mean=0, centered=0 -> h3n=0 (inert).

    # ---- layer 4 + tanh, lane-dense (B, 128) output slab -------------------
    h4 = jnp.dot(h3n, w4_ref[...], preferred_element_type=jnp.float32) + b4_ref[...]
    out_ref[...] = jnp.tanh(h4)


def actor_forward(s_t, r_t, padded_params, dim_output):
    """s_t: [B, dim_s], r_t: [B, dim_r]; padded_params: lane-padded W/b dict."""
    B = s_t.shape[0]

    args = (s_t, r_t,
            padded_params["w1"], padded_params["b1"],
            padded_params["w2"], padded_params["b2"],
            padded_params["w3"], padded_params["b3"],
            padded_params["w4"], padded_params["b4"])

    # Tiny working set -> single grid point, every operand as one full block.
    full_spec = lambda a: pl.BlockSpec(a.shape, lambda: (0,) * a.ndim)

    out_padded = pl.pallas_call(
        actor_kernel,
        out_shape=jax.ShapeDtypeStruct((B, LANE), jnp.float32),
        in_specs=[full_spec(a) for a in args],
        out_specs=pl.BlockSpec((B, LANE), lambda: (0, 0)),
    )(*args)

    # Only the first dim_output lanes carry real data.
    return out_padded[:, :dim_output]


def init_params(key, dim_input, dim_output):
    """Deterministic init mimicking nn.Linear default U[-1/sqrt(fan_in), +]."""
    dims = [(dim_input, SIZE_H1), (SIZE_H1, SIZE_H2),
            (SIZE_H2, SIZE_H3), (SIZE_H3, dim_output)]
    params = {}
    keys = jax.random.split(key, 2 * len(dims))
    for i, (fan_in, fan_out) in enumerate(dims):
        bound = 1.0 / math.sqrt(fan_in)
        params[f"w{i+1}"] = jax.random.uniform(
            keys[2 * i], (fan_in, fan_out), jnp.float32, -bound, bound)
        params[f"b{i+1}"] = jax.random.uniform(
            keys[2 * i + 1], (1, fan_out), jnp.float32, -bound, bound)
    return params


def pad_params(params, dim_input):
    """Zero-pad all feature dims to the 128-lane width, once, kept resident.

    Zero padding is inert: padded hidden units stay exactly 0 through
    ReLU / BatchNorm (mean=var=0 -> normalized 0) / the zero rows of the next
    weight, so the unpadded math is reproduced bit-for-bit up to fp rounding.
    """
    def pad2d(a, rows, cols):
        out = jnp.zeros((rows, cols), a.dtype)
        return out.at[:a.shape[0], :a.shape[1]].set(a)

    h1p = h2p = h3p = outp = LANE
    return {
        "w1": pad2d(params["w1"], dim_input, h1p),
        "b1": pad2d(params["b1"], 1, h1p),
        "w2": pad2d(params["w2"], h1p, h2p),
        "b2": pad2d(params["b2"], 1, h2p),
        "w3": pad2d(params["w3"], h2p, h3p),
        "b3": pad2d(params["b3"], 1, h3p),
        "w4": pad2d(params["w4"], h3p, outp),
        "b4": pad2d(params["b4"], 1, outp),
    }


def reference_forward(s_t, r_t, p):
    """Pure-JAX reference on the unpadded parameters."""
    x = jnp.concatenate([s_t, r_t], axis=1)
    h1 = jnp.maximum(x @ p["w1"] + p["b1"], 0.0)
    h2 = jnp.maximum(h1 @ p["w2"] + p["b2"], 0.0)
    h3 = h2 @ p["w3"] + p["b3"]
    mean = jnp.mean(h3, axis=0, keepdims=True)
    var = jnp.mean((h3 - mean) ** 2, axis=0, keepdims=True)
    h3n = (h3 - mean) * jax.lax.rsqrt(var + BN_EPS)
    return jnp.tanh(h3n @ p["w4"] + p["b4"])


if __name__ == "__main__":
    key = jax.random.PRNGKey(0)
    k_s, k_r, k_p = jax.random.split(key, 3)

    # Mountain-car-like sizes: state dim 2, reward dim 1, action dim 1, batch 8.
    batch, dim_s, dim_r, dim_output = 8, 2, 1, 1
    dim_input = dim_s + dim_r

    s_t = jax.random.normal(k_s, (batch, dim_s), jnp.float32)
    r_t = jax.random.normal(k_r, (batch, dim_r), jnp.float32)

    params = init_params(k_p, dim_input, dim_output)
    padded = pad_params(params, dim_input)   # pad once, reuse across calls

    # TODO(synk): aux_array argument of the PyTorch forward is unused there
    # and is therefore not part of this kernel's signature.

    out = jax.block_until_ready(actor_forward(s_t, r_t, padded, dim_output))
    ref = reference_forward(s_t, r_t, params)

    assert out.shape == (batch, dim_output)
    assert jnp.allclose(out, ref, atol=1e-4, rtol=1e-4), (
        f"max abs err {jnp.max(jnp.abs(out - ref))}")
    print("KERNEL_OK")
</pallas_src>

<mosaic_0001>
module attributes {stable_mosaic.version = 11 : i64} {
  func.func @actor_kernel(%arg0: memref<8x2xf32, #tpu.memory_space<vmem>>, %arg1: memref<8x1xf32, #tpu.memory_space<vmem>>, %arg2: memref<3x128xf32, #tpu.memory_space<vmem>>, %arg3: memref<1x128xf32, #tpu.memory_space<vmem>>, %arg4: memref<128x128xf32, #tpu.memory_space<vmem>>, %arg5: memref<1x128xf32, #tpu.memory_space<vmem>>, %arg6: memref<128x128xf32, #tpu.memory_space<vmem>>, %arg7: memref<1x128xf32, #tpu.memory_space<vmem>>, %arg8: memref<128x128xf32, #tpu.memory_space<vmem>>, %arg9: memref<1x128xf32, #tpu.memory_space<vmem>>, %arg10: memref<8x128xf32, #tpu.memory_space<vmem>>) attributes {dimension_semantics = [], scalar_prefetch = 0 : i64, scratch_operands = 0 : i64, tpu.core_type = #tpu.core_type<tc>} {
    %c0 = arith.constant 0 : index
    %c0_0 = arith.constant 0 : index
    %0 = vector.load %arg0[%c0, %c0_0] : memref<8x2xf32, #tpu.memory_space<vmem>>, vector<8x2xf32>
    %c0_1 = arith.constant 0 : index
    %c0_2 = arith.constant 0 : index
    %1 = vector.load %arg1[%c0_1, %c0_2] : memref<8x1xf32, #tpu.memory_space<vmem>>, vector<8x1xf32>
    %c0_3 = arith.constant 0 : index
    %c0_4 = arith.constant 0 : index
    %2 = vector.load %arg3[%c0_3, %c0_4] : memref<1x128xf32, #tpu.memory_space<vmem>>, vector<1x128xf32>
    %3 = vector.extract_strided_slice %0 {offsets = [0, 0], sizes = [8, 1], strides = [1, 1]} : vector<8x2xf32> to vector<8x1xf32>
    %c0_5 = arith.constant 0 : index
    %c0_6 = arith.constant 0 : index
    %4 = vector.load %arg2[%c0_5, %c0_6] : memref<3x128xf32, #tpu.memory_space<vmem>>, vector<1x128xf32>
    %5 = vector.broadcast %3 : vector<8x1xf32> to vector<8x128xf32>
    %6 = vector.broadcast %4 : vector<1x128xf32> to vector<8x128xf32>
    %7 = arith.mulf %5, %6 : vector<8x128xf32>
    %8 = vector.broadcast %2 : vector<1x128xf32> to vector<8x128xf32>
    %9 = arith.addf %8, %7 : vector<8x128xf32>
    %10 = vector.extract_strided_slice %0 {offsets = [0, 1], sizes = [8, 1], strides = [1, 1]} : vector<8x2xf32> to vector<8x1xf32>
    %c1 = arith.constant 1 : index
    %c0_7 = arith.constant 0 : index
    %11 = vector.load %arg2[%c1, %c0_7] : memref<3x128xf32, #tpu.memory_space<vmem>>, vector<1x128xf32>
    %12 = vector.broadcast %10 : vector<8x1xf32> to vector<8x128xf32>
    %13 = vector.broadcast %11 : vector<1x128xf32> to vector<8x128xf32>
    %14 = arith.mulf %12, %13 : vector<8x128xf32>
    %15 = arith.addf %9, %14 : vector<8x128xf32>
    %c2 = arith.constant 2 : index
    %c0_8 = arith.constant 0 : index
    %16 = vector.load %arg2[%c2, %c0_8] : memref<3x128xf32, #tpu.memory_space<vmem>>, vector<1x128xf32>
    %17 = vector.broadcast %1 : vector<8x1xf32> to vector<8x128xf32>
    %18 = vector.broadcast %16 : vector<1x128xf32> to vector<8x128xf32>
    %19 = arith.mulf %17, %18 : vector<8x128xf32>
    %20 = arith.addf %15, %19 : vector<8x128xf32>
    %cst = arith.constant 0.000000e+00 : f32
    %21 = vector.broadcast %cst : f32 to vector<8x128xf32>
    %22 = arith.maximumf %20, %21 : vector<8x128xf32>
    %c0_9 = arith.constant 0 : index
    %c0_10 = arith.constant 0 : index
    %23 = vector.load %arg4[%c0_9, %c0_10] : memref<128x128xf32, #tpu.memory_space<vmem>>, vector<128x128xf32>
    %cst_11 = arith.constant dense<0.000000e+00> : vector<8x128xf32>
    %24 = tpu.matmul %22, %23, %cst_11 {dimension_numbers = #tpu.dot_dimension_numbers<[1], [0], [0], [1], [0, 0, 1, 1], [], []>} : vector<8x128xf32>, vector<128x128xf32>, vector<8x128xf32> -> vector<8x128xf32>
    %c0_12 = arith.constant 0 : index
    %c0_13 = arith.constant 0 : index
    %25 = vector.load %arg5[%c0_12, %c0_13] : memref<1x128xf32, #tpu.memory_space<vmem>>, vector<1x128xf32>
    %26 = vector.broadcast %25 : vector<1x128xf32> to vector<8x128xf32>
    %27 = arith.addf %24, %26 : vector<8x128xf32>
    %cst_14 = arith.constant 0.000000e+00 : f32
    %28 = vector.broadcast %cst_14 : f32 to vector<8x128xf32>
    %29 = arith.maximumf %27, %28 : vector<8x128xf32>
    %c0_15 = arith.constant 0 : index
    %c0_16 = arith.constant 0 : index
    %30 = vector.load %arg6[%c0_15, %c0_16] : memref<128x128xf32, #tpu.memory_space<vmem>>, vector<128x128xf32>
    %cst_17 = arith.constant dense<0.000000e+00> : vector<8x128xf32>
    %31 = tpu.matmul %29, %30, %cst_17 {dimension_numbers = #tpu.dot_dimension_numbers<[1], [0], [0], [1], [0, 0, 1, 1], [], []>} : vector<8x128xf32>, vector<128x128xf32>, vector<8x128xf32> -> vector<8x128xf32>
    %c0_18 = arith.constant 0 : index
    %c0_19 = arith.constant 0 : index
    %32 = vector.load %arg7[%c0_18, %c0_19] : memref<1x128xf32, #tpu.memory_space<vmem>>, vector<1x128xf32>
    %33 = vector.broadcast %32 : vector<1x128xf32> to vector<8x128xf32>
    %34 = arith.addf %31, %33 : vector<8x128xf32>
    %cst_20 = arith.constant dense<0.000000e+00> : vector<128xf32>
    %35 = vector.multi_reduction <add>, %34, %cst_20 [0] : vector<8x128xf32> to vector<128xf32>
    %36 = vector.shape_cast %35 : vector<128xf32> to vector<1x128xf32>
    %cst_21 = arith.constant 8.000000e+00 : f32
    %37 = vector.broadcast %cst_21 : f32 to vector<1x128xf32>
    %38 = arith.divf %36, %37 : vector<1x128xf32>
    %39 = vector.broadcast %38 : vector<1x128xf32> to vector<8x128xf32>
    %40 = arith.subf %34, %39 : vector<8x128xf32>
    %41 = arith.mulf %40, %40 : vector<8x128xf32>
    %cst_22 = arith.constant dense<0.000000e+00> : vector<128xf32>
    %42 = vector.multi_reduction <add>, %41, %cst_22 [0] : vector<8x128xf32> to vector<128xf32>
    %43 = vector.shape_cast %42 : vector<128xf32> to vector<1x128xf32>
    %cst_23 = arith.constant 8.000000e+00 : f32
    %44 = vector.broadcast %cst_23 : f32 to vector<1x128xf32>
    %45 = arith.divf %43, %44 : vector<1x128xf32>
    %cst_24 = arith.constant 9.99999974E-6 : f32
    %46 = vector.broadcast %cst_24 : f32 to vector<1x128xf32>
    %47 = arith.addf %45, %46 : vector<1x128xf32>
    %48 = math.rsqrt %47 : vector<1x128xf32>
    %49 = vector.broadcast %48 : vector<1x128xf32> to vector<8x128xf32>
    %50 = arith.mulf %40, %49 : vector<8x128xf32>
    %c0_25 = arith.constant 0 : index
    %c0_26 = arith.constant 0 : index
    %51 = vector.load %arg8[%c0_25, %c0_26] : memref<128x128xf32, #tpu.memory_space<vmem>>, vector<128x128xf32>
    %cst_27 = arith.constant dense<0.000000e+00> : vector<8x128xf32>
    %52 = tpu.matmul %50, %51, %cst_27 {dimension_numbers = #tpu.dot_dimension_numbers<[1], [0], [0], [1], [0, 0, 1, 1], [], []>} : vector<8x128xf32>, vector<128x128xf32>, vector<8x128xf32> -> vector<8x128xf32>
    %c0_28 = arith.constant 0 : index
    %c0_29 = arith.constant 0 : index
    %53 = vector.load %arg9[%c0_28, %c0_29] : memref<1x128xf32, #tpu.memory_space<vmem>>, vector<1x128xf32>
    %54 = vector.broadcast %53 : vector<1x128xf32> to vector<8x128xf32>
    %55 = arith.addf %52, %54 : vector<8x128xf32>
    %56 = math.tanh %55 : vector<8x128xf32>
    %c0_30 = arith.constant 0 : index
    %c0_31 = arith.constant 0 : index
    %57 = vector.load %arg10[%c0_30, %c0_31] : memref<8x128xf32, #tpu.memory_space<vmem>>, vector<8x128xf32>
    tpu.vector_store %arg10[%c0_30, %c0_31], %56 {strides = array<i32>} : memref<8x128xf32, #tpu.memory_space<vmem>>, vector<8x128xf32>,
    return
  }
}

</mosaic_0001>

<llo_original>
// kernel: tpu_custom_call.1
$region0: #{tpu_custom_call.1}
  #allocation0 [shape = 'u32[]', space=smem, size = 0x4, offset = 0x4, fixed_abs, tag = 'smem constant byte address 0x4 - core index']
  #allocation1 [shape = 'u32[144,128]{1,0:T(1,128)}', space=vmem, size = 0x12000, scoped, tag = 'internal scratch']
  %s0 = inlined_call_operand.vmem [shape: f32[8,2], index: 0, kind: input, shape index: {}]
  %s1 = inlined_call_operand.vmem [shape: f32[8,1], index: 1, kind: input, shape index: {}]
  %s2 = inlined_call_operand.vmem [shape: f32[3,128], index: 2, kind: input, shape index: {}]
  %s3 = inlined_call_operand.vmem [shape: f32[1,128], index: 3, kind: input, shape index: {}]
  %s4 = inlined_call_operand.hbm [shape: f32[128,128], index: 4, kind: input, shape index: {}]
  %s5 = inlined_call_operand.vmem [shape: f32[1,128], index: 5, kind: input, shape index: {}]
  %s6 = inlined_call_operand.hbm [shape: f32[128,128], index: 6, kind: input, shape index: {}]
  %s7 = inlined_call_operand.vmem [shape: f32[1,128], index: 7, kind: input, shape index: {}]
  %s8 = inlined_call_operand.hbm [shape: f32[128,128], index: 8, kind: input, shape index: {}]
  %s9 = inlined_call_operand.vmem [shape: f32[1,128], index: 9, kind: input, shape index: {}]
  %s10 = inlined_call_operand.hbm [shape: f32[8,128], index: 10, kind: output, shape index: {}]
  %s11 = sld [smem:[#allocation0]]
  $region62: #{tpu_custom_call.1} parent=0
    _
  %s13 = ssub.s32 1, %s11
  %s14 = scalar_select 0, %s13, %s11
  $region1: #{tpu_custom_call.1} parent=0
    #allocation2 [shape = 'u8[65536]{0}', space=vmem, size = 0x10000, scoped, tag = 'input window, operand 4, single buffered']
    #allocation3 [shape = 's32[1]{0}', space=sflag, size = 0x4, scoped, tag = 'scoped memory for tpu_custom_call.1']
    #allocation4 [shape = 's32[1]{0}', space=sflag, size = 0x4, scoped, tag = 'scoped memory for tpu_custom_call.1']
    #allocation5 [shape = 'u8[65536]{0}', space=vmem, size = 0x10000, scoped, tag = 'input window, operand 6, single buffered']
    #allocation6 [shape = 's32[1]{0}', space=sflag, size = 0x4, scoped, tag = 'scoped memory for tpu_custom_call.1']
    #allocation7 [shape = 'u8[65536]{0}', space=vmem, size = 0x10000, scoped, tag = 'input window, operand 8, single buffered']
    #allocation8 [shape = 'u8[4096]{0}', space=vmem, size = 0x1000, scoped, tag = 'output window, operand 0, single buffered']
    %15 = vsyncpa [#allocation3], 0
    %16 = vsyncpa [#allocation6], 0
    %17 = vsyncpa [#allocation4], 0
    // Predicated region
    $region2: #{tpu_custom_call.1} parent=1 // pred_check
      _
    $region3: #{tpu_custom_call.1} parent=1 // pred_check_branch
      %19 = sbr.rel (0) target = $region5
    $region4: #{tpu_custom_call.1} parent=1 // pred_region
      _
    $region5: #{tpu_custom_call.1} parent=1 // pred_fallthru
      _
    // Predicated region
    $region6: #{tpu_custom_call.1} parent=1 // pred_check
      _
    $region7: #{tpu_custom_call.1} parent=1 // pred_check_branch
      %21 = sbr.rel (0) target = $region9
    $region8: #{tpu_custom_call.1} parent=1 // pred_region
      _
    $region9: #{tpu_custom_call.1} parent=1 // pred_fallthru
      _
    // Predicated region
    $region10: #{tpu_custom_call.1} parent=1 // pred_check
      _
    $region11: #{tpu_custom_call.1} parent=1 // pred_check_branch
      %23 = sbr.rel (0) target = $region13
    $region12: #{tpu_custom_call.1} parent=1 // pred_region
      _
    $region13: #{tpu_custom_call.1} parent=1 // pred_fallthru
      _
    // Predicated region
    $region14: #{tpu_custom_call.1} parent=1 // pred_check
      _
    $region15: #{tpu_custom_call.1} parent=1 // pred_check_branch
      %25 = sbr.rel (0) target = $region17
    $region16: #{tpu_custom_call.1} parent=1 // pred_region
      _
    $region17: #{tpu_custom_call.1} parent=1 // pred_fallthru
      _
    // Predicated region
    $region18: #{tpu_custom_call.1} parent=1 // pred_check
      _
    $region19: #{tpu_custom_call.1} parent=1 // pred_check_branch
      %27 = sbr.rel (0) target = $region21
    $region20: #{tpu_custom_call.1} parent=1 // pred_region
      %s29 = ssub.s32 2048, 2048
      %30 = vsyncadd [#allocation3], %s29
      %s31 = sshll.u32 [#allocation2], 4
      %s32 = int_to_ptr.vmem [resolvable:$true] %s31
      %37 = dma.hbm_to_vmem [thread:$0]  %s4, 2048, %s32, [#allocation3], 128, 128, 8
    $region21: #{tpu_custom_call.1} parent=1 // pred_fallthru
      _
    // Predicated region
    $region22: #{tpu_custom_call.1} parent=1 // pred_check
      _
    $region23: #{tpu_custom_call.1} parent=1 // pred_check_branch
      %39 = sbr.rel (0) target = $region25
    $region24: #{tpu_custom_call.1} parent=1 // pred_region
      _
    $region25: #{tpu_custom_call.1} parent=1 // pred_fallthru
      _
    // Predicated region
    $region26: #{tpu_custom_call.1} parent=1 // pred_check
      _
    $region27: #{tpu_custom_call.1} parent=1 // pred_check_branch
      %41 = sbr.rel (0) target = $region29
    $region28: #{tpu_custom_call.1} parent=1 // pred_region
      %s43 = ssub.s32 2048, 2048
      %44 = vsyncadd [#allocation6], %s43
      %s45 = sshll.u32 [#allocation5], 4
      %s46 = int_to_ptr.vmem [resolvable:$true] %s45
      %51 = dma.hbm_to_vmem [thread:$0]  %s6, 2048, %s46, [#allocation6], 128, 128, 8
    $region29: #{tpu_custom_call.1} parent=1 // pred_fallthru
      _
    // Predicated region
    $region30: #{tpu_custom_call.1} parent=1 // pred_check
      _
    $region31: #{tpu_custom_call.1} parent=1 // pred_check_branch
      %53 = sbr.rel (0) target = $region33
    $region32: #{tpu_custom_call.1} parent=1 // pred_region
      _
    $region33: #{tpu_custom_call.1} parent=1 // pred_fallthru
      _
    // Predicated region
    $region34: #{tpu_custom_call.1} parent=1 // pred_check
      _
    $region35: #{tpu_custom_call.1} parent=1 // pred_check_branch
      %55 = sbr.rel (0) target = $region37
    $region36: #{tpu_custom_call.1} parent=1 // pred_region
      %s57 = ssub.s32 2048, 2048
      %58 = vsyncadd [#allocation6], %s57
      %s59 = sshll.u32 [#allocation7], 4
      %s60 = int_to_ptr.vmem [resolvable:$true] %s59
      %65 = dma.hbm_to_vmem [thread:$0]  %s8, 2048, %s60, [#allocation6], 128, 128, 8
    $region37: #{tpu_custom_call.1} parent=1 // pred_fallthru
      _
    // Predicated region
    $region38: #{tpu_custom_call.1} parent=1 // pred_check
      _
    $region39: #{tpu_custom_call.1} parent=1 // pred_check_branch
      %67 = sbr.rel (0) target = $region41
    $region40: #{tpu_custom_call.1} parent=1 // pred_region
      _
    $region41: #{tpu_custom_call.1} parent=1 // pred_fallthru
      _
    // Predicated region
    $region42: #{tpu_custom_call.1} parent=1 // pred_check
      _
    $region43: #{tpu_custom_call.1} parent=1 // pred_check_branch
      %69 = sbr.rel (0) target = $region45
    $region44: #{tpu_custom_call.1} parent=1 // pred_region
      %70 = dma.done [#allocation3], 2048
    $region45: #{tpu_custom_call.1} parent=1 // pred_fallthru
      _
    // Predicated region
    $region46: #{tpu_custom_call.1} parent=1 // pred_check
      _
    $region47: #{tpu_custom_call.1} parent=1 // pred_check_branch
      %72 = sbr.rel (0) target = $region49
    $region48: #{tpu_custom_call.1} parent=1 // pred_region
      %73 = dma.done [#allocation6], 2048
    $region49: #{tpu_custom_call.1} parent=1 // pred_fallthru
      _
    // Predicated region
    $region50: #{tpu_custom_call.1} parent=1 // pred_check
      _
    $region51: #{tpu_custom_call.1} parent=1 // pred_check_branch
      %75 = sbr.rel (0) target = $region53
    $region52: #{tpu_custom_call.1} parent=1 // pred_region
      %76 = dma.done [#allocation6], 2048
    $region53: #{tpu_custom_call.1} parent=1 // pred_fallthru
      _
    %v77 = vld [vmem:[%s0] sm:$0xff]
    %v78 = vld [vmem:[%s1] sm:$0xff]
    %v79 = vld [vmem:[%s3] sm:$0x1]
    %v80 = vld [vmem:[%s2] sm:$0x1]
    %82 = vset.pattern.permute.xlu0 0
    %83 = vperm.xlu0 %82, %v77
    %v84 = vpop.permute.xlu0 %83
    %v86 = vlaneseq
    %v87 = vshrl.u32 %v86, 7
    %v88 = vsub.s32 0, %v87
    %v89 = vrot.slane %v80, %v88
    %v90 = vmul.f32 %v84, %v89
    %v92 = vlaneseq
    %v93 = vshrl.u32 %v92, 7
    %v94 = vsub.s32 0, %v93
    %v95 = vrot.slane %v79, %v94
    %v97 = vadd.f32 %v95, %v90
    %v98 = vld [vmem:[%s2 + $0x1] sm:$0x1]
    %99 = vset.pattern.permute.xlu0 1
    %100 = vperm.xlu0 %99, %v77
    %v101 = vpop.permute.xlu0 %100
    %v103 = vlaneseq
    %v104 = vshrl.u32 %v103, 7
    %v105 = vsub.s32 0, %v104
    %v106 = vrot.slane %v98, %v105
    %v107 = vmul.f32 %v101, %v106
    %v108 = vadd.f32 %v97, %v107
    %v109 = vld [vmem:[%s2 + $0x2] sm:$0x1]
    %111 = vset.pattern.permute.xlu0 0
    %112 = vperm.xlu0 %111, %v78
    %v113 = vpop.permute.xlu0 %112
    %v115 = vlaneseq
    %v116 = vshrl.u32 %v115, 7
    %v117 = vsub.s32 0, %v116
    %v118 = vrot.slane %v109, %v117
    %v119 = vmul.f32 %v113, %v118
    %v120 = vadd.f32 %v108, %v119
    %v121 = vmax.f32 %v120, 0.0
    %v122 = vld [vmem:[#allocation2] sm:$0xff]
    %v123 = vld [vmem:[#allocation2 + $0x8] sm:$0xff]
    %v124 = vld [vmem:[#allocation2 + $0x10] sm:$0xff]
    %v125 = vld [vmem:[#allocation2 + $0x18] sm:$0xff]
    %v126 = vld [vmem:[#allocation2 + $0x20] sm:$0xff]
    %v127 = vld [vmem:[#allocation2 + $0x28] sm:$0xff]
    %v128 = vld [vmem:[#allocation2 + $0x30] sm:$0xff]
    %v129 = vld [vmem:[#allocation2 + $0x38] sm:$0xff]
    %v130 = vld [vmem:[#allocation2 + $0x40] sm:$0xff]
    %v131 = vld [vmem:[#allocation2 + $0x48] sm:$0xff]
    %v132 = vld [vmem:[#allocation2 + $0x50] sm:$0xff]
    %v133 = vld [vmem:[#allocation2 + $0x58] sm:$0xff]
    %v134 = vld [vmem:[#allocation2 + $0x60] sm:$0xff]
    %v135 = vld [vmem:[#allocation2 + $0x68] sm:$0xff]
    %v136 = vld [vmem:[#allocation2 + $0x70] sm:$0xff]
    %v137 = vld [vmem:[#allocation2 + $0x78] sm:$0xff]
    %v138 = vld [vmem:[%s5] sm:$0x1]
    %v140 = vlaneseq
    %v141 = vshrl.u32 %v140, 7
    %v142 = vsub.s32 0, %v141
    %v143 = vrot.slane %v138, %v142
    %145 = vmatprep.subr.mxu0 0.0
    %146 = vmatpush1.msra.mxu0 %v137
    %147 = vmatprep.subr.mxu0 0.0
    %148 = vmatpush1.msra.mxu0 %v136
    %149 = vmatprep.subr.mxu0 0.0
    %150 = vmatpush1.msra.mxu0 %v135
    %151 = vmatprep.subr.mxu0 0.0
    %152 = vmatpush1.msra.mxu0 %v134
    %153 = vmatprep.subr.mxu0 0.0
    %154 = vmatpush1.msra.mxu0 %v133
    %155 = vmatprep.subr.mxu0 0.0
    %156 = vmatpush1.msra.mxu0 %v132
    %157 = vmatprep.subr.mxu0 0.0
    %158 = vmatpush1.msra.mxu0 %v131
    %159 = vmatprep.subr.mxu0 0.0
    %160 = vmatpush1.msra.mxu0 %v130
    %161 = vmatprep.subr.mxu0 0.0
    %162 = vmatpush1.msra.mxu0 %v129
    %163 = vmatprep.subr.mxu0 0.0
    %164 = vmatpush1.msra.mxu0 %v128
    %165 = vmatprep.subr.mxu0 0.0
    %166 = vmatpush1.msra.mxu0 %v127
    %167 = vmatprep.subr.mxu0 0.0
    %168 = vmatpush1.msra.mxu0 %v126
    %169 = vmatprep.subr.mxu0 0.0
    %170 = vmatpush1.msra.mxu0 %v125
    %171 = vmatprep.subr.mxu0 0.0
    %172 = vmatpush1.msra.mxu0 %v124
    %173 = vmatprep.subr.mxu0 0.0
    %174 = vmatpush1.msra.mxu0 %v123
    %175 = vmatprep.subr.mxu0 0.0
    %176 = vmatpush1.msra.mxu0 %v122
    %177 = vmatprep.subr.mxu0 0.0
    %178 = vmatpush2.msra.mxu0 0.0
    %179 = vmatprep.subr.mxu0 0.0
    %180 = vmatpush2.msra.mxu0 0.0
    %181 = vmatprep.subr.mxu0 0.0
    %182 = vmatpush2.msra.mxu0 0.0
    %183 = vmatprep.subr.mxu0 0.0
    %184 = vmatpush2.msra.mxu0 0.0
    %185 = vmatprep.subr.mxu0 0.0
    %186 = vmatpush2.msra.mxu0 0.0
    %187 = vmatprep.subr.mxu0 0.0
    %188 = vmatpush2.msra.mxu0 0.0
    %189 = vmatprep.subr.mxu0 0.0
    %190 = vmatpush2.msra.mxu0 0.0
    %191 = vmatprep.subr.mxu0 0.0
    %192 = vmatpush2.msra.mxu0 0.0
    %193 = vmatprep.subr.mxu0 0.0
    %194 = vmatpush2.msra.mxu0 0.0
    %195 = vmatprep.subr.mxu0 0.0
    %196 = vmatpush2.msra.mxu0 0.0
    %197 = vmatprep.subr.mxu0 0.0
    %198 = vmatpush2.msra.mxu0 0.0
    %199 = vmatprep.subr.mxu0 0.0
    %200 = vmatpush2.msra.mxu0 0.0
    %201 = vmatprep.subr.mxu0 0.0
    %202 = vmatpush2.msra.mxu0 0.0
    %203 = vmatprep.subr.mxu0 0.0
    %204 = vmatpush2.msra.mxu0 0.0
    %205 = vmatprep.subr.mxu0 0.0
    %206 = vmatpush2.msra.mxu0 0.0
    %207 = vmatprep.subr.mxu0 0.0
    %208 = vmatpush2.msra.mxu0 0.0
    %209 = vmatprep.mubr.f32.mxu0 0.0
    %210 = vmatmul.mubr.f32.gmra.mxu0 %v121
    %v211 = vpop.f32.mrf.mxu0
    %v212 = vadd.f32 %v143, %v211
    %v213 = vpop.f32.mrf.mxu0
    %214 = vdwg.mxu0
    %v215 = vmax.f32 %v212, 0.0
    %v216 = vld [vmem:[#allocation5] sm:$0xff]
    %v217 = vld [vmem:[#allocation5 + $0x8] sm:$0xff]
    %v218 = vld [vmem:[#allocation5 + $0x10] sm:$0xff]
    %v219 = vld [vmem:[#allocation5 + $0x18] sm:$0xff]
    %v220 = vld [vmem:[#allocation5 + $0x20] sm:$0xff]
    %v221 = vld [vmem:[#allocation5 + $0x28] sm:$0xff]
    %v222 = vld [vmem:[#allocation5 + $0x30] sm:$0xff]
    %v223 = vld [vmem:[#allocation5 + $0x38] sm:$0xff]
    %v224 = vld [vmem:[#allocation5 + $0x40] sm:$0xff]
    %v225 = vld [vmem:[#allocation5 + $0x48] sm:$0xff]
    %v226 = vld [vmem:[#allocation5 + $0x50] sm:$0xff]
    %v227 = vld [vmem:[#allocation5 + $0x58] sm:$0xff]
    %v228 = vld [vmem:[#allocation5 + $0x60] sm:$0xff]
    %v229 = vld [vmem:[#allocation5 + $0x68] sm:$0xff]
    %v230 = vld [vmem:[#allocation5 + $0x70] sm:$0xff]
    %v231 = vld [vmem:[#allocation5 + $0x78] sm:$0xff]
    %v232 = vld [vmem:[%s7] sm:$0x1]
    %v234 = vlaneseq
    %v235 = vshrl.u32 %v234, 7
    %v236 = vsub.s32 0, %v235
    %v237 = vrot.slane %v232, %v236
    %239 = vmatprep.subr.mxu0 0.0
    %240 = vmatpush1.msra.mxu0 %v231
    %241 = vmatprep.subr.mxu0 0.0
    %242 = vmatpush1.msra.mxu0 %v230
    %243 = vmatprep.subr.mxu0 0.0
    %244 = vmatpush1.msra.mxu0 %v229
    %245 = vmatprep.subr.mxu0 0.0
    %246 = vmatpush1.msra.mxu0 %v228
    %247 = vmatprep.subr.mxu0 0.0
    %248 = vmatpush1.msra.mxu0 %v227
    %249 = vmatprep.subr.mxu0 0.0
    %250 = vmatpush1.msra.mxu0 %v226
    %251 = vmatprep.subr.mxu0 0.0
    %252 = vmatpush1.msra.mxu0 %v225
    %253 = vmatprep.subr.mxu0 0.0
    %254 = vmatpush1.msra.mxu0 %v224
    %255 = vmatprep.subr.mxu0 0.0
    %256 = vmatpush1.msra.mxu0 %v223
    %257 = vmatprep.subr.mxu0 0.0
    %258 = vmatpush1.msra.mxu0 %v222
    %259 = vmatprep.subr.mxu0 0.0
    %260 = vmatpush1.msra.mxu0 %v221
    %261 = vmatprep.subr.mxu0 0.0
    %262 = vmatpush1.msra.mxu0 %v220
    %263 = vmatprep.subr.mxu0 0.0
    %264 = vmatpush1.msra.mxu0 %v219
    %265 = vmatprep.subr.mxu0 0.0
    %266 = vmatpush1.msra.mxu0 %v218
    %267 = vmatprep.subr.mxu0 0.0
    %268 = vmatpush1.msra.mxu0 %v217
    %269 = vmatprep.subr.mxu0 0.0
    %270 = vmatpush1.msra.mxu0 %v216
    %271 = vmatprep.subr.mxu0 0.0
    %272 = vmatpush2.msra.mxu0 0.0
    %273 = vmatprep.subr.mxu0 0.0
    %274 = vmatpush2.msra.mxu0 0.0
    %275 = vmatprep.subr.mxu0 0.0
    %276 = vmatpush2.msra.mxu0 0.0
    %277 = vmatprep.subr.mxu0 0.0
    %278 = vmatpush2.msra.mxu0 0.0
    %279 = vmatprep.subr.mxu0 0.0
    %280 = vmatpush2.msra.mxu0 0.0
    %281 = vmatprep.subr.mxu0 0.0
    %282 = vmatpush2.msra.mxu0 0.0
    %283 = vmatprep.subr.mxu0 0.0
    %284 = vmatpush2.msra.mxu0 0.0
    %285 = vmatprep.subr.mxu0 0.0
    %286 = vmatpush2.msra.mxu0 0.0
    %287 = vmatprep.subr.mxu0 0.0
    %288 = vmatpush2.msra.mxu0 0.0
    %289 = vmatprep.subr.mxu0 0.0
    %290 = vmatpush2.msra.mxu0 0.0
    %291 = vmatprep.subr.mxu0 0.0
    %292 = vmatpush2.msra.mxu0 0.0
    %293 = vmatprep.subr.mxu0 0.0
    %294 = vmatpush2.msra.mxu0 0.0
    %295 = vmatprep.subr.mxu0 0.0
    %296 = vmatpush2.msra.mxu0 0.0
    %297 = vmatprep.subr.mxu0 0.0
    %298 = vmatpush2.msra.mxu0 0.0
    %299 = vmatprep.subr.mxu0 0.0
    %300 = vmatpush2.msra.mxu0 0.0
    %301 = vmatprep.subr.mxu0 0.0
    %302 = vmatpush2.msra.mxu0 0.0
    %303 = vmatprep.mubr.f32.mxu0 0.0
    %304 = vmatmul.mubr.f32.gmra.mxu0 %v215
    %v305 = vpop.f32.mrf.mxu0
    %v306 = vadd.f32 %v237, %v305
    %v307 = vpop.f32.mrf.mxu0
    %308 = vdwg.mxu0
    %v309 = vrot.slane %v306, 4
    %v310 = vadd.f32 %v306, %v309
    %v311 = vrot.slane %v310, 2
    %v312 = vadd.f32 %v310, %v311
    %v313 = vrot.slane %v312, 1
    %v314 = vadd.f32 %v312, %v313
    %v315 = vrcp.pop 8.0
    %v316 = vmul.f32 %v314, %v315
    %v317 = vsub.f32 %v306, %v316
    %v318 = vmul.f32 %v317, %v317
    %v319 = vrot.slane %v318, 4
    %v320 = vadd.f32 %v318, %v319
    %v321 = vrot.slane %v320, 2
    %v322 = vadd.f32 %v320, %v321
    %v323 = vrot.slane %v322, 1
    %v324 = vadd.f32 %v322, %v323
    %v325 = vmul.f32 %v324, %v315
    %v326 = vadd.f32 %v325, 1e-05
    %v327 = vrsqrt.pop %v326
    %v328 = vmul.f32 %v317, %v327
    %v329 = vld [vmem:[#allocation7] sm:$0xff]
    %v330 = vld [vmem:[#allocation7 + $0x8] sm:$0xff]
    %v331 = vld [vmem:[#allocation7 + $0x10] sm:$0xff]
    %v332 = vld [vmem:[#allocation7 + $0x18] sm:$0xff]
    %v333 = vld [vmem:[#allocation7 + $0x20] sm:$0xff]
    %v334 = vld [vmem:[#allocation7 + $0x28] sm:$0xff]
    %v335 = vld [vmem:[#allocation7 + $0x30] sm:$0xff]
    %v336 = vld [vmem:[#allocation7 + $0x38] sm:$0xff]
    %v337 = vld [vmem:[#allocation7 + $0x40] sm:$0xff]
    %v338 = vld [vmem:[#allocation7 + $0x48] sm:$0xff]
    %v339 = vld [vmem:[#allocation7 + $0x50] sm:$0xff]
    %v340 = vld [vmem:[#allocation7 + $0x58] sm:$0xff]
    %v341 = vld [vmem:[#allocation7 + $0x60] sm:$0xff]
    %v342 = vld [vmem:[#allocation7 + $0x68] sm:$0xff]
    %v343 = vld [vmem:[#allocation7 + $0x70] sm:$0xff]
    %v344 = vld [vmem:[#allocation7 + $0x78] sm:$0xff]
    %v345 = vld [vmem:[%s9] sm:$0x1]
    %v347 = vlaneseq
    %v348 = vshrl.u32 %v347, 7
    %v349 = vsub.s32 0, %v348
    %v350 = vrot.slane %v345, %v349
    %352 = vmatprep.subr.mxu0 0.0
    %353 = vmatpush1.msra.mxu0 %v344
    %354 = vmatprep.subr.mxu0 0.0
    %355 = vmatpush1.msra.mxu0 %v343
    %356 = vmatprep.subr.mxu0 0.0
    %357 = vmatpush1.msra.mxu0 %v342
    %358 = vmatprep.subr.mxu0 0.0
    %359 = vmatpush1.msra.mxu0 %v341
    %360 = vmatprep.subr.mxu0 0.0
    %361 = vmatpush1.msra.mxu0 %v340
    %362 = vmatprep.subr.mxu0 0.0
    %363 = vmatpush1.msra.mxu0 %v339
    %364 = vmatprep.subr.mxu0 0.0
    %365 = vmatpush1.msra.mxu0 %v338
    %366 = vmatprep.subr.mxu0 0.0
    %367 = vmatpush1.msra.mxu0 %v337
    %368 = vmatprep.subr.mxu0 0.0
    %369 = vmatpush1.msra.mxu0 %v336
    %370 = vmatprep.subr.mxu0 0.0
    %371 = vmatpush1.msra.mxu0 %v335
    %372 = vmatprep.subr.mxu0 0.0
    %373 = vmatpush1.msra.mxu0 %v334
    %374 = vmatprep.subr.mxu0 0.0
    %375 = vmatpush1.msra.mxu0 %v333
    %376 = vmatprep.subr.mxu0 0.0
    %377 = vmatpush1.msra.mxu0 %v332
    %378 = vmatprep.subr.mxu0 0.0
    %379 = vmatpush1.msra.mxu0 %v331
    %380 = vmatprep.subr.mxu0 0.0
    %381 = vmatpush1.msra.mxu0 %v330
    %382 = vmatprep.subr.mxu0 0.0
    %383 = vmatpush1.msra.mxu0 %v329
    %384 = vmatprep.subr.mxu0 0.0
    %385 = vmatpush2.msra.mxu0 0.0
    %386 = vmatprep.subr.mxu0 0.0
    %387 = vmatpush2.msra.mxu0 0.0
    %388 = vmatprep.subr.mxu0 0.0
    %389 = vmatpush2.msra.mxu0 0.0
    %390 = vmatprep.subr.mxu0 0.0
    %391 = vmatpush2.msra.mxu0 0.0
    %392 = vmatprep.subr.mxu0 0.0
    %393 = vmatpush2.msra.mxu0 0.0
    %394 = vmatprep.subr.mxu0 0.0
    %395 = vmatpush2.msra.mxu0 0.0
    %396 = vmatprep.subr.mxu0 0.0
    %397 = vmatpush2.msra.mxu0 0.0
    %398 = vmatprep.subr.mxu0 0.0
    %399 = vmatpush2.msra.mxu0 0.0
    %400 = vmatprep.subr.mxu0 0.0
    %401 = vmatpush2.msra.mxu0 0.0
    %402 = vmatprep.subr.mxu0 0.0
    %403 = vmatpush2.msra.mxu0 0.0
    %404 = vmatprep.subr.mxu0 0.0
    %405 = vmatpush2.msra.mxu0 0.0
    %406 = vmatprep.subr.mxu0 0.0
    %407 = vmatpush2.msra.mxu0 0.0
    %408 = vmatprep.subr.mxu0 0.0
    %409 = vmatpush2.msra.mxu0 0.0
    %410 = vmatprep.subr.mxu0 0.0
    %411 = vmatpush2.msra.mxu0 0.0
    %412 = vmatprep.subr.mxu0 0.0
    %413 = vmatpush2.msra.mxu0 0.0
    %414 = vmatprep.subr.mxu0 0.0
    %415 = vmatpush2.msra.mxu0 0.0
    %416 = vmatprep.mubr.f32.mxu0 0.0
    %417 = vmatmul.mubr.f32.gmra.mxu0 %v328
    %v418 = vpop.f32.mrf.mxu0
    %v419 = vadd.f32 %v350, %v418
    %v420 = vpop.f32.mrf.mxu0
    %421 = vdwg.mxu0
    %v422 = vtanh.pop %v419
    %423 = vst [vmem:[#allocation8] sm:$0xff] %v422
    // Predicated region
    $region54: #{tpu_custom_call.1} parent=1 // pred_check
      _
    $region55: #{tpu_custom_call.1} parent=1 // pred_check_branch
      %425 = sbr.rel (0) target = $region57
    $region56: #{tpu_custom_call.1} parent=1 // pred_region
      %s427 = ssub.s32 128, 128
      %428 = vsyncadd [#allocation4], %s427
      %s430 = sshll.u32 [#allocation8], 4
      %s431 = int_to_ptr.vmem [resolvable:$true] %s430
      %433 = dma.vmem_to_hbm [thread:$0]  %s431, 128, %s10, [#allocation4]
    $region57: #{tpu_custom_call.1} parent=1 // pred_fallthru
      _
    // Predicated region
    $region58: #{tpu_custom_call.1} parent=1 // pred_check
      _
    $region59: #{tpu_custom_call.1} parent=1 // pred_check_branch
      %435 = sbr.rel (0) target = $region61
    $region60: #{tpu_custom_call.1} parent=1 // pred_region
      %436 = dma.done [#allocation4], 128
    $region61: #{tpu_custom_call.1} parent=1 // pred_fallthru
      _
    %437 = vsyncpa [#allocation3], 1
    %438 = vsyncpa [#allocation6], 1
    %439 = vsyncpa [#allocation4], 1

</llo_original>
